<compile_context>
chip_gen: v7x
topology: tpu7x:2x2x1
jax: 0.10.0
libtpu: 0.0.40
codegen_flags: <defaults>
</compile_context>

<pallas_src>
import functools

import jax
import jax.numpy as jnp
import numpy as np
from jax.experimental import pallas as pl
from jax.experimental.pallas import tpu as pltpu


# ----------------------------- Pallas kernels --------------------------------
def _encode_kernel(M, S,
                   emb_ref,      # VMEM (1, S, D) f32  segment embeds of batch b
                   mem_ref,      # VMEM (M, D)    f32  memory token embeddings
                   pos_ref,      # VMEM (T, D)    f32  pre-permuted pos embeds
                   w1_ref,       # VMEM (D, D)    bf16 base-model dense weight
                   b1_ref,       # VMEM (1, D)    f32  base-model dense bias
                   hid_seg_ref,  # out  (1, S, D) bf16 segment hidden states
                   new_mem_ref,  # out  (1, M, D) f32  new memory state
                   x_scr):       # VMEM scratch (T, D) f32
    T = 2 * M + S
    mem = mem_ref[...]                                     # (M, D)
    # inputs_embeds = cat([memory, embeds, memory]) fused with pos embeddings
    # (pos table pre-permuted to [0..M-1, 2M..2M+S-1, M..2M-1] order).
    # f32 scratch -> split points (M, M+S) only need to be multiples of 8.
    x_scr[0:M, :]     = mem + pos_ref[0:M, :]              # read memory
    x_scr[M:M + S, :] = emb_ref[0] + pos_ref[M:M + S, :]   # segment tokens
    x_scr[M + S:T, :] = mem + pos_ref[M + S:T, :]          # write memory

    # synthetic base-model hot path: bf16 operands on the MXU, f32 accumulate.
    hidden = jax.nn.gelu(
        jnp.dot(x_scr[...].astype(jnp.bfloat16), w1_ref[...],
                preferred_element_type=jnp.float32) + b1_ref[...],
        approximate=True)                                  # (T, D) f32

    hid_seg_ref[...] = hidden[M:M + S, :][None].astype(hid_seg_ref.dtype)
    new_mem_ref[...] = hidden[T - M:T, :][None].astype(new_mem_ref.dtype)


def _lm_head_kernel(hid_ref,      # VMEM (tr, D) bf16  hidden rows (resident over vocab axis)
                    wlm_ref,      # VMEM (D, tv) bf16  lm-head vocab tile (pipelined)
                    logits_ref):  # out  (tr, tv) bf16 segment logits tile
    logits_ref[...] = jnp.dot(
        hid_ref[...], wlm_ref[...],
        preferred_element_type=jnp.float32).astype(logits_ref.dtype)


# ------------------------------- wrapper -------------------------------------
def memory_cell_forward(input_ids, memory, emb_table, pos_table, w1, b1, wlm,
                        attention_mask=None, vocab_tile=512, row_tile=512,
                        vmem_limit_bytes=48 * 1024 * 1024):
    """MemoryCell.forward with memory_state=None (memory replicated per batch).

    vocab_tile / vmem_limit_bytes defaults are sized for v7x's 64 MiB VMEM
    (bf16 weights); on v5e/v6e they can be raised (tv up to ~2048,
    vmem_limit_bytes toward ~96 MiB) to cut per-grid-step overhead further.
    """
    B, S = input_ids.shape
    M, D = memory.shape
    V = wlm.shape[1]
    T = 2 * M + S

    # --- process_input glue (plain JAX, one-time, cheap) ---------------------
    embeds = jnp.take(emb_table, input_ids.astype(jnp.int32), axis=0)  # (B,S,D)
    pos_ids = jnp.concatenate([jnp.arange(M),
                               jnp.arange(2 * M, 2 * M + S),
                               jnp.arange(M, 2 * M)])
    pos_perm = jnp.take(pos_table, pos_ids, axis=0)                    # (T, D)

    # bf16 matmul operands (MXU-native on v5e/v6e/v7x), f32 accumulation.
    w1_bf = w1.astype(jnp.bfloat16)
    wlm_bf = wlm.astype(jnp.bfloat16)

    # --- pass 1: [mem | seg | mem] + dense + gelu -> hidden / new memory -----
    encode = functools.partial(_encode_kernel, M, S)
    hid_seg, new_memory = pl.pallas_call(
        encode,
        grid_spec=pltpu.PrefetchScalarGridSpec(
            num_scalar_prefetch=0,
            grid=(B,),
            in_specs=[
                pl.BlockSpec((1, S, D), lambda b: (b, 0, 0)),   # segment embeds
                pl.BlockSpec((M, D),    lambda b: (0, 0)),      # memory tokens
                pl.BlockSpec((T, D),    lambda b: (0, 0)),      # permuted pos emb
                pl.BlockSpec((D, D),    lambda b: (0, 0)),      # w1 (bf16)
                pl.BlockSpec((1, D),    lambda b: (0, 0)),      # b1
            ],
            out_specs=[
                pl.BlockSpec((1, S, D), lambda b: (b, 0, 0)),   # segment hidden
                pl.BlockSpec((1, M, D), lambda b: (b, 0, 0)),   # new memory
            ],
            scratch_shapes=[pltpu.VMEM((T, D), jnp.float32)],
        ),
        out_shape=(
            jax.ShapeDtypeStruct((B, S, D), jnp.bfloat16),
            jax.ShapeDtypeStruct((B, M, D), jnp.float32),
        ),
        compiler_params=pltpu.CompilerParams(
            dimension_semantics=("parallel",),
            vmem_limit_bytes=vmem_limit_bytes),
    )(embeds, memory, pos_perm, w1_bf, b1)

    # --- pass 2: lm head over flattened (B*S, D) rows, tiled over vocab ------
    R = B * S
    hid_flat = hid_seg.reshape(R, D)                 # bf16, batch-blocked LHS
    tr = min(row_tile, R)
    tv = min(vocab_tile, V)
    assert R % tr == 0, "B*S must be divisible by the row tile"
    assert V % tv == 0, "vocab size must be divisible by the vocab tile"
    nr, nv = R // tr, V // tv

    logits_flat = pl.pallas_call(
        _lm_head_kernel,
        grid_spec=pltpu.PrefetchScalarGridSpec(
            num_scalar_prefetch=0,
            grid=(nr, nv),
            in_specs=[
                pl.BlockSpec((tr, D), lambda i, j: (i, 0)),   # hidden rows (resident over j)
                pl.BlockSpec((D, tv), lambda i, j: (0, j)),   # lm-head tile (pipelined)
            ],
            out_specs=pl.BlockSpec((tr, tv), lambda i, j: (i, j)),
        ),
        out_shape=jax.ShapeDtypeStruct((R, V), jnp.bfloat16),  # bf16 logits writeback
        compiler_params=pltpu.CompilerParams(
            dimension_semantics=("parallel", "parallel"),
            vmem_limit_bytes=vmem_limit_bytes),
    )(hid_flat, wlm_bf)
    logits = logits_flat.reshape(B, S, V)

    # --- process_output glue --------------------------------------------------
    if attention_mask is not None:
        ones = jnp.ones((B, M), dtype=attention_mask.dtype)
        attention_mask = jnp.concatenate([ones, attention_mask, ones], axis=1)

    out = {"logits": logits, "hidden_states": hid_seg,
           "attention_mask": attention_mask}
    return out, new_memory


# --------------------------- pure-JAX reference -------------------------------
def _reference(input_ids, memory, emb_table, pos_table, w1, b1, wlm):
    """Mirrors the kernel's bf16-operand / f32-accumulate matmul precision."""
    B, S = input_ids.shape
    M, D = memory.shape
    mem_b = jnp.broadcast_to(memory[None], (B, M, D))
    embeds = emb_table[input_ids]                        # (B, S, D)
    x = jnp.concatenate([mem_b, embeds, mem_b], axis=1)  # (B, T, D)
    pos_ids = jnp.concatenate([jnp.arange(M),
                               jnp.arange(2 * M, 2 * M + S),
                               jnp.arange(M, 2 * M)])
    x = x + pos_table[pos_ids][None]
    hidden = jax.nn.gelu(
        jnp.einsum('btd,de->bte', x.astype(jnp.bfloat16),
                   w1.astype(jnp.bfloat16),
                   preferred_element_type=jnp.float32) + b1,
        approximate=True)
    hid_seg = hidden[:, M:-M]
    logits = jnp.einsum('btd,dv->btv', hid_seg.astype(jnp.bfloat16),
                        wlm.astype(jnp.bfloat16),
                        preferred_element_type=jnp.float32)
    return logits, hid_seg, hidden[:, -M:]


# --------------------------------- main --------------------------------------
if __name__ == "__main__":
    # lane-dense sizes: D, V multiples of 128; M, S multiples of 8
    B, S, M, D, V = 2, 16, 8, 128, 256
    T = 2 * M + S

    key = jax.random.PRNGKey(0)
    k_mem, k_emb, k_pos, k_w1, k_b1, k_lm, k_ids = jax.random.split(key, 7)

    memory    = jax.random.normal(k_mem, (M, D), jnp.float32)        # torch.randn
    emb_table = jax.random.normal(k_emb, (V, D), jnp.float32) * 0.1
    pos_table = jax.random.normal(k_pos, (T, D), jnp.float32) * 0.1
    w1        = jax.random.normal(k_w1, (D, D), jnp.float32) * (1.0 / np.sqrt(D))
    b1        = jax.random.normal(k_b1, (1, D), jnp.float32) * 0.01
    wlm       = jax.random.normal(k_lm, (D, V), jnp.float32) * (1.0 / np.sqrt(D))

    input_ids = jax.random.randint(k_ids, (B, S), 0, V, jnp.int32)
    attention_mask = jnp.ones((B, S), jnp.float32)

    # vocab_tile=128 at this toy V=256 so the vocab grid axis is exercised;
    # at real vocab sizes use the default (512) or larger on v5e/v6e.
    out, new_memory_state = memory_cell_forward(
        input_ids, memory, emb_table, pos_table, w1, b1, wlm,
        attention_mask=attention_mask, vocab_tile=128)
    jax.block_until_ready((out, new_memory_state))

    # correctness check against pure-JAX reference (same bf16 matmul precision)
    ref_logits, ref_hidden, ref_mem = _reference(
        input_ids, memory, emb_table, pos_table, w1, b1, wlm)
    np.testing.assert_allclose(np.asarray(out["logits"], dtype=np.float32),
                               np.asarray(ref_logits), rtol=2e-2, atol=2e-2)
    np.testing.assert_allclose(np.asarray(out["hidden_states"], dtype=np.float32),
                               np.asarray(ref_hidden), rtol=2e-2, atol=2e-2)
    np.testing.assert_allclose(np.asarray(new_memory_state),
                               np.asarray(ref_mem), rtol=2e-2, atol=2e-2)
    assert out["attention_mask"].shape == (B, T)
    assert new_memory_state.shape == (B, M, D)
    assert out["logits"].shape == (B, S, V)

    print("KERNEL_OK")
</pallas_src>

<mosaic_0001>
module attributes {stable_mosaic.version = 11 : i64} {
  func.func @_encode_kernel(%arg0: i32, %arg1: memref<1x16x128xf32, #tpu.memory_space<vmem>>, %arg2: memref<8x128xf32, #tpu.memory_space<vmem>>, %arg3: memref<32x128xf32, #tpu.memory_space<vmem>>, %arg4: memref<128x128xbf16, #tpu.memory_space<vmem>>, %arg5: memref<1x128xf32, #tpu.memory_space<vmem>>, %arg6: memref<1x16x128xbf16, #tpu.memory_space<vmem>>, %arg7: memref<1x8x128xf32, #tpu.memory_space<vmem>>, %arg8: memref<32x128xf32, #tpu.memory_space<vmem>>) attributes {dimension_semantics = [#tpu.dimension_semantics<parallel>], iteration_bounds = array<i64: 2>, scalar_prefetch = 0 : i64, scratch_operands = 1 : i64, tpu.core_type = #tpu.core_type<tc>, window_params = [{transform_indices = @transform_0, window_bounds = array<i64: 1, 16, 128>}, {pipeline_mode = #tpu.pipeline_mode<synchronous>, transform_indices = @transform_1, window_bounds = array<i64: 8, 128>}, {pipeline_mode = #tpu.pipeline_mode<synchronous>, transform_indices = @transform_2, window_bounds = array<i64: 32, 128>}, {pipeline_mode = #tpu.pipeline_mode<synchronous>, transform_indices = @transform_3, window_bounds = array<i64: 128, 128>}, {pipeline_mode = #tpu.pipeline_mode<synchronous>, transform_indices = @transform_4, window_bounds = array<i64: 1, 128>}, {transform_indices = @transform_5, window_bounds = array<i64: 1, 16, 128>}, {transform_indices = @transform_6, window_bounds = array<i64: 1, 8, 128>}]} {
    %c0 = arith.constant 0 : index
    %c0_0 = arith.constant 0 : index
    %0 = vector.load %arg2[%c0, %c0_0] : memref<8x128xf32, #tpu.memory_space<vmem>>, vector<8x128xf32>
    %c0_1 = arith.constant 0 : index
    %c0_2 = arith.constant 0 : index
    %1 = vector.load %arg3[%c0_1, %c0_2] : memref<32x128xf32, #tpu.memory_space<vmem>>, vector<8x128xf32>
    %2 = arith.addf %0, %1 : vector<8x128xf32>
    %c0_3 = arith.constant 0 : index
    %c0_4 = arith.constant 0 : index
    %3 = vector.load %arg8[%c0_3, %c0_4] : memref<32x128xf32, #tpu.memory_space<vmem>>, vector<8x128xf32>
    tpu.vector_store %arg8[%c0_3, %c0_4], %2 {strides = array<i32>} : memref<32x128xf32, #tpu.memory_space<vmem>>, vector<8x128xf32>,
    %c0_5 = arith.constant 0 : index
    %c0_6 = arith.constant 0 : index
    %c0_7 = arith.constant 0 : index
    %4 = vector.load %arg1[%c0_5, %c0_6, %c0_7] : memref<1x16x128xf32, #tpu.memory_space<vmem>>, vector<1x16x128xf32>
    %5 = vector.shape_cast %4 : vector<1x16x128xf32> to vector<16x128xf32>
    %c8 = arith.constant 8 : index
    %c0_8 = arith.constant 0 : index
    %6 = vector.load %arg3[%c8, %c0_8] : memref<32x128xf32, #tpu.memory_space<vmem>>, vector<16x128xf32>
    %7 = arith.addf %5, %6 : vector<16x128xf32>
    %c8_9 = arith.constant 8 : index
    %c0_10 = arith.constant 0 : index
    %8 = vector.load %arg8[%c8_9, %c0_10] : memref<32x128xf32, #tpu.memory_space<vmem>>, vector<16x128xf32>
    tpu.vector_store %arg8[%c8_9, %c0_10], %7 {strides = array<i32>} : memref<32x128xf32, #tpu.memory_space<vmem>>, vector<16x128xf32>,
    %c24 = arith.constant 24 : index
    %c0_11 = arith.constant 0 : index
    %9 = vector.load %arg3[%c24, %c0_11] : memref<32x128xf32, #tpu.memory_space<vmem>>, vector<8x128xf32>
    %10 = arith.addf %0, %9 : vector<8x128xf32>
    %c24_12 = arith.constant 24 : index
    %c0_13 = arith.constant 0 : index
    %11 = vector.load %arg8[%c24_12, %c0_13] : memref<32x128xf32, #tpu.memory_space<vmem>>, vector<8x128xf32>
    tpu.vector_store %arg8[%c24_12, %c0_13], %10 {strides = array<i32>} : memref<32x128xf32, #tpu.memory_space<vmem>>, vector<8x128xf32>,
    %c0_14 = arith.constant 0 : index
    %c0_15 = arith.constant 0 : index
    %12 = vector.load %arg8[%c0_14, %c0_15] : memref<32x128xf32, #tpu.memory_space<vmem>>, vector<32x128xf32>
    %13 = arith.truncf %12 : vector<32x128xf32> to vector<32x128xbf16>
    %c0_16 = arith.constant 0 : index
    %c0_17 = arith.constant 0 : index
    %14 = vector.load %arg4[%c0_16, %c0_17] : memref<128x128xbf16, #tpu.memory_space<vmem>>, vector<128x128xbf16>
    %cst = arith.constant dense<0.000000e+00> : vector<32x128xf32>
    %15 = tpu.matmul %13, %14, %cst {dimension_numbers = #tpu.dot_dimension_numbers<[1], [0], [0], [1], [0, 0, 1, 1], [], []>} : vector<32x128xbf16>, vector<128x128xbf16>, vector<32x128xf32> -> vector<32x128xf32>
    %c0_18 = arith.constant 0 : index
    %c0_19 = arith.constant 0 : index
    %16 = vector.load %arg5[%c0_18, %c0_19] : memref<1x128xf32, #tpu.memory_space<vmem>>, vector<1x128xf32>
    %17 = vector.broadcast %16 : vector<1x128xf32> to vector<32x128xf32>
    %18 = arith.addf %15, %17 : vector<32x128xf32>
    %19 = arith.mulf %18, %18 : vector<32x128xf32>
    %20 = arith.mulf %18, %19 : vector<32x128xf32>
    %cst_20 = arith.constant 4.471500e-02 : f32
    %21 = vector.broadcast %cst_20 : f32 to vector<32x128xf32>
    %22 = arith.mulf %21, %20 : vector<32x128xf32>
    %23 = arith.addf %18, %22 : vector<32x128xf32>
    %cst_21 = arith.constant 0.797884583 : f32
    %24 = vector.broadcast %cst_21 : f32 to vector<32x128xf32>
    %25 = arith.mulf %24, %23 : vector<32x128xf32>
    %26 = math.tanh %25 : vector<32x128xf32>
    %cst_22 = arith.constant 1.000000e+00 : f32
    %27 = vector.broadcast %cst_22 : f32 to vector<32x128xf32>
    %28 = arith.addf %27, %26 : vector<32x128xf32>
    %cst_23 = arith.constant 5.000000e-01 : f32
    %29 = vector.broadcast %cst_23 : f32 to vector<32x128xf32>
    %30 = arith.mulf %29, %28 : vector<32x128xf32>
    %31 = arith.mulf %18, %30 : vector<32x128xf32>
    %32 = vector.extract_strided_slice %31 {offsets = [8, 0], sizes = [16, 128], strides = [1, 1]} : vector<32x128xf32> to vector<16x128xf32>
    %33 = vector.shape_cast %32 : vector<16x128xf32> to vector<1x16x128xf32>
    %34 = arith.truncf %33 : vector<1x16x128xf32> to vector<1x16x128xbf16>
    %c0_24 = arith.constant 0 : index
    %c0_25 = arith.constant 0 : index
    %c0_26 = arith.constant 0 : index
    %35 = vector.load %arg6[%c0_24, %c0_25, %c0_26] : memref<1x16x128xbf16, #tpu.memory_space<vmem>>, vector<1x16x128xbf16>
    tpu.vector_store %arg6[%c0_24, %c0_25, %c0_26], %34 {strides = array<i32>} : memref<1x16x128xbf16, #tpu.memory_space<vmem>>, vector<1x16x128xbf16>,
    %36 = vector.extract_strided_slice %31 {offsets = [24, 0], sizes = [8, 128], strides = [1, 1]} : vector<32x128xf32> to vector<8x128xf32>
    %37 = vector.shape_cast %36 : vector<8x128xf32> to vector<1x8x128xf32>
    %c0_27 = arith.constant 0 : index
    %c0_28 = arith.constant 0 : index
    %c0_29 = arith.constant 0 : index
    %38 = vector.load %arg7[%c0_27, %c0_28, %c0_29] : memref<1x8x128xf32, #tpu.memory_space<vmem>>, vector<1x8x128xf32>
    tpu.vector_store %arg7[%c0_27, %c0_28, %c0_29], %37 {strides = array<i32>} : memref<1x8x128xf32, #tpu.memory_space<vmem>>, vector<1x8x128xf32>,
    return
  }
  func.func @transform_0(%arg0: i32) -> (i32, i32, i32) {
    %c0_i32 = arith.constant 0 : i32
    %c0_i32_0 = arith.constant 0 : i32
    %c0_i32_1 = arith.constant 0 : i32
    return %arg0, %c0_i32, %c0_i32_0 : i32, i32, i32
  }
  func.func @transform_1(%arg0: i32) -> (i32, i32) {
    %c0_i32 = arith.constant 0 : i32
    %c0_i32_0 = arith.constant 0 : i32
    %c0_i32_1 = arith.constant 0 : i32
    return %c0_i32, %c0_i32_0 : i32, i32
  }
  func.func @transform_2(%arg0: i32) -> (i32, i32) {
    %c0_i32 = arith.constant 0 : i32
    %c0_i32_0 = arith.constant 0 : i32
    %c0_i32_1 = arith.constant 0 : i32
    return %c0_i32, %c0_i32_0 : i32, i32
  }
  func.func @transform_3(%arg0: i32) -> (i32, i32) {
    %c0_i32 = arith.constant 0 : i32
    %c0_i32_0 = arith.constant 0 : i32
    %c0_i32_1 = arith.constant 0 : i32
    return %c0_i32, %c0_i32_0 : i32, i32
  }
  func.func @transform_4(%arg0: i32) -> (i32, i32) {
    %c0_i32 = arith.constant 0 : i32
    %c0_i32_0 = arith.constant 0 : i32
    %c0_i32_1 = arith.constant 0 : i32
    return %c0_i32, %c0_i32_0 : i32, i32
  }
  func.func @transform_5(%arg0: i32) -> (i32, i32, i32) {
    %c0_i32 = arith.constant 0 : i32
    %c0_i32_0 = arith.constant 0 : i32
    %c0_i32_1 = arith.constant 0 : i32
    return %arg0, %c0_i32, %c0_i32_0 : i32, i32, i32
  }
  func.func @transform_6(%arg0: i32) -> (i32, i32, i32) {
    %c0_i32 = arith.constant 0 : i32
    %c0_i32_0 = arith.constant 0 : i32
    %c0_i32_1 = arith.constant 0 : i32
    return %arg0, %c0_i32, %c0_i32_0 : i32, i32, i32
  }
}

</mosaic_0001>

<llo_original>
// kernel: tpu_custom_call.1
$region0: #{tpu_custom_call.1}
  #allocation0 [shape = 'u32[]', space=smem, size = 0x4, offset = 0x4, fixed_abs, tag = 'smem constant byte address 0x4 - core index']
  #allocation1 [shape = 'u32[144,128]{1,0:T(1,128)}', space=vmem, size = 0x12000, scoped, tag = 'internal scratch']
  #allocation2 [shape = 'f32[32,128]{1,0:T(8,128)}', space=vmem, size = 0x4000, scoped, tag = 'scratch operand']
  %s0 = inlined_call_operand.hbm [shape: f32[2,16,128], index: 0, kind: input, shape index: {}]
  %s1 = inlined_call_operand.hbm [shape: f32[8,128], index: 1, kind: input, shape index: {}]
  %s2 = inlined_call_operand.hbm [shape: f32[32,128], index: 2, kind: input, shape index: {}]
  %s3 = inlined_call_operand.hbm [shape: bf16[128,128], index: 3, kind: input, shape index: {}]
  %s4 = inlined_call_operand.vmem [shape: f32[1,128], index: 4, kind: input, shape index: {}]
  %s5 = inlined_call_operand.hbm [shape: bf16[2,16,128], index: 5, kind: output, shape index: {0}]
  %s6 = inlined_call_operand.hbm [shape: f32[2,8,128], index: 6, kind: output, shape index: {1}]
  %7 = xla_tuple %s5, %s6
  %s8 = sld [smem:[#allocation0]]
  $region77: #{tpu_custom_call.1} parent=0
    _
  %s10 = ssub.s32 1, %s8
  %s11 = scalar_select 0, %s10, %s8
  $region1: #{tpu_custom_call.1} parent=0
    #allocation3 [shape = 'u8[16384]{0}', space=vmem, size = 0x4000, scoped, tag = 'input window, operand 0']
    #allocation4 [shape = 's32[2]{0}', space=sflag, size = 0x8, scoped, tag = 'scoped memory for tpu_custom_call.1']
    #allocation5 [shape = 's32[2]{0}', space=sflag, size = 0x8, scoped, tag = 'scoped memory for tpu_custom_call.1']
    #allocation6 [shape = 'u8[4096]{0}', space=vmem, size = 0x1000, scoped, tag = 'input window, operand 1, single buffered']
    #allocation7 [shape = 's32[1]{0}', space=sflag, size = 0x4, scoped, tag = 'scoped memory for tpu_custom_call.1']
    #allocation8 [shape = 'u8[16384]{0}', space=vmem, size = 0x4000, scoped, tag = 'input window, operand 2, single buffered']
    #allocation9 [shape = 'u8[32768]{0}', space=vmem, size = 0x8000, scoped, tag = 'input window, operand 3, single buffered']
    #allocation10 [shape = 's32[1]{0}', space=sflag, size = 0x4, scoped, tag = 'scoped memory for tpu_custom_call.1']
    #allocation11 [shape = 'u8[8192]{0}', space=vmem, size = 0x2000, scoped, tag = 'output window, operand 0']
    #allocation12 [shape = 'u8[8192]{0}', space=vmem, size = 0x2000, scoped, tag = 'output window, operand 1']
    #allocation13 [shape = 's32[2]{0}', space=sflag, size = 0x8, scoped, tag = 'scoped memory for tpu_custom_call.1']
    %12 = vsyncpa [#allocation4], 0
    %s13 = scalar_lea.sflag [#allocation4], 1
    %14 = vsyncpa %s13, 0
    %15 = vsyncpa [#allocation7], 0
    %16 = vsyncpa [#allocation10], 0
    %17 = vsyncpa [#allocation5], 0
    %s18 = scalar_lea.sflag [#allocation5], 1
    %19 = vsyncpa %s18, 0
    %20 = vsyncpa [#allocation13], 0
    %s21 = scalar_lea.sflag [#allocation13], 1
    %22 = vsyncpa %s21, 0
    loop: start=0, step=1, limit=4
    $region2: #{tpu_custom_call.1} parent=1 // loop_pre_header
      _
    $region3: #{tpu_custom_call.1} parent=1 // loop_header
      %s24 = sphi 0, %s28
      %p25 = scmp.ge.s32.totalorder %s24, 4
      %s34 = sphi 0, %s36
      %s37 = sphi 0, %s34
      %s38 = sphi 0, %s37
      %s54 = sphi 0, %s38
      %s58 = sphi 0, %s58
      %s60 = sphi 0, %s58
      %s61 = sphi 0, %s60
      %s75 = sphi 0, %s61
      %s79 = sphi 0, %s79
      %s81 = sphi 0, %s79
      %s82 = sphi 0, %s81
      %s96 = sphi 0, %s82
      %s100 = sphi 0, %s100
      %s102 = sphi 0, %s100
      %s103 = sphi 0, %s102
      %s117 = sphi 0, %s103
      %s121 = sphi 0, %s121
      %s123 = sphi 0, %s121
      %s124 = sphi 0, %s123
      %s138 = sphi 0, %s124
      %s144 = sphi 0, %s146
      %s147 = sphi 0, %s144
      %s148 = sphi 0, %s147
      %s164 = sphi 0, %s148
      %s170 = sphi 0, %s172
      %s173 = sphi 0, %s170
      %s174 = sphi 0, %s173
      %s190 = sphi 0, %s174
    $region4: #{tpu_custom_call.1} parent=1 // loop_header_branch
      %27 = sbr.rel (%p25) target = $region8
    $region5: #{tpu_custom_call.1} parent=1 // loop_body
      %s29 = ssub.s32 %s24, 1
      %s30 = ssub.s32 %s24, 2
      %s31 = sadd.s32 %s24, 1
      %s32 = ssub.s32 %s24, %s31
      %p33 = scmp.eq.s32.totalorder %s32, 0
      %s35 = sadd.s32 %s34, 1
      %s36 = scalar_select %p33, %s34, %s35
      %p39 = pneg %p33
      %p40 = scmp.eq.s32.totalorder %s24, 1
      %p41 = por %p39, %p40
      %p42 = scmp.ne.s32.totalorder %s34, %s37
      %p43 = scmp.eq.s32.totalorder %s24, 0
      %p44 = por %p42, %p43
      %p45 = scmp.ne.s32.totalorder %s34, %s37
      %p46 = scmp.eq.s32.totalorder %s29, 1
      %p47 = por %p45, %p46
      %p48 = scmp.ne.s32.totalorder %s37, %s38
      %p49 = scmp.eq.s32.totalorder %s29, 0
      %p50 = por %p48, %p49
      %p51 = scmp.ne.s32.totalorder %s37, %s38
      %p52 = scmp.eq.s32.totalorder %s30, 1
      %p53 = por %p51, %p52
      %p55 = scmp.ne.s32.totalorder %s38, %s54
      %p56 = scmp.eq.s32.totalorder %s30, 0
      %p57 = por %p55, %p56
      %s59 = sadd.s32 %s58, 1
      %p62 = scmp.eq.s32.totalorder %s24, 1
      %p63 = scmp.ne.s32.totalorder %s58, %s60
      %p64 = scmp.eq.s32.totalorder %s24, 0
      %p65 = por %p63, %p64
      %p66 = scmp.ne.s32.totalorder %s58, %s60
      %p67 = scmp.eq.s32.totalorder %s29, 1
      %p68 = por %p66, %p67
      %p69 = scmp.ne.s32.totalorder %s60, %s61
      %p70 = scmp.eq.s32.totalorder %s29, 0
      %p71 = por %p69, %p70
      %p72 = scmp.ne.s32.totalorder %s60, %s61
      %p73 = scmp.eq.s32.totalorder %s30, 1
      %p74 = por %p72, %p73
      %p76 = scmp.ne.s32.totalorder %s61, %s75
      %p77 = scmp.eq.s32.totalorder %s30, 0
      %p78 = por %p76, %p77
      %s80 = sadd.s32 %s79, 1
      %p83 = scmp.eq.s32.totalorder %s24, 1
      %p84 = scmp.ne.s32.totalorder %s79, %s81
      %p85 = scmp.eq.s32.totalorder %s24, 0
      %p86 = por %p84, %p85
      %p87 = scmp.ne.s32.totalorder %s79, %s81
      %p88 = scmp.eq.s32.totalorder %s29, 1
      %p89 = por %p87, %p88
      %p90 = scmp.ne.s32.totalorder %s81, %s82
      %p91 = scmp.eq.s32.totalorder %s29, 0
      %p92 = por %p90, %p91
      %p93 = scmp.ne.s32.totalorder %s81, %s82
      %p94 = scmp.eq.s32.totalorder %s30, 1
      %p95 = por %p93, %p94
      %p97 = scmp.ne.s32.totalorder %s82, %s96
      %p98 = scmp.eq.s32.totalorder %s30, 0
      %p99 = por %p97, %p98
      %s101 = sadd.s32 %s100, 1
      %p104 = scmp.eq.s32.totalorder %s24, 1
      %p105 = scmp.ne.s32.totalorder %s100, %s102
      %p106 = scmp.eq.s32.totalorder %s24, 0
      %p107 = por %p105, %p106
      %p108 = scmp.ne.s32.totalorder %s100, %s102
      %p109 = scmp.eq.s32.totalorder %s29, 1
      %p110 = por %p108, %p109
      %p111 = scmp.ne.s32.totalorder %s102, %s103
      %p112 = scmp.eq.s32.totalorder %s29, 0
      %p113 = por %p111, %p112
      %p114 = scmp.ne.s32.totalorder %s102, %s103
      %p115 = scmp.eq.s32.totalorder %s30, 1
      %p116 = por %p114, %p115
      %p118 = scmp.ne.s32.totalorder %s103, %s117
      %p119 = scmp.eq.s32.totalorder %s30, 0
      %p120 = por %p118, %p119
      %s122 = sadd.s32 %s121, 1
      %p125 = scmp.eq.s32.totalorder %s24, 1
      %p126 = scmp.ne.s32.totalorder %s121, %s123
      %p127 = scmp.eq.s32.totalorder %s24, 0
      %p128 = por %p126, %p127
      %p129 = scmp.ne.s32.totalorder %s121, %s123
      %p130 = scmp.eq.s32.totalorder %s29, 1
      %p131 = por %p129, %p130
      %p132 = scmp.ne.s32.totalorder %s123, %s124
      %p133 = scmp.eq.s32.totalorder %s29, 0
      %p134 = por %p132, %p133
      %p135 = scmp.ne.s32.totalorder %s123, %s124
      %p136 = scmp.eq.s32.totalorder %s30, 1
      %p137 = por %p135, %p136
      %p139 = scmp.ne.s32.totalorder %s124, %s138
      %p140 = scmp.eq.s32.totalorder %s30, 0
      %p141 = por %p139, %p140
      %s142 = ssub.s32 %s24, %s31
      %p143 = scmp.eq.s32.totalorder %s142, 0
      %s145 = sadd.s32 %s144, 1
      %s146 = scalar_select %p143, %s144, %s145
      %p149 = pneg %p143
      %p150 = scmp.eq.s32.totalorder %s24, 1
      %p151 = por %p149, %p150
      %p152 = scmp.ne.s32.totalorder %s144, %s147
      %p153 = scmp.eq.s32.totalorder %s24, 0
      %p154 = por %p152, %p153
      %p155 = scmp.ne.s32.totalorder %s144, %s147
      %p156 = scmp.eq.s32.totalorder %s29, 1
      %p157 = por %p155, %p156
      %p158 = scmp.ne.s32.totalorder %s147, %s148
      %p159 = scmp.eq.s32.totalorder %s29, 0
      %p160 = por %p158, %p159
      %p161 = scmp.ne.s32.totalorder %s147, %s148
      %p162 = scmp.eq.s32.totalorder %s30, 1
      %p163 = por %p161, %p162
      %p165 = scmp.ne.s32.totalorder %s148, %s164
      %p166 = scmp.eq.s32.totalorder %s30, 0
      %p167 = por %p165, %p166
      %s168 = ssub.s32 %s24, %s31
      %p169 = scmp.eq.s32.totalorder %s168, 0
      %s171 = sadd.s32 %s170, 1
      %s172 = scalar_select %p169, %s170, %s171
      %p175 = pneg %p169
      %p176 = scmp.eq.s32.totalorder %s24, 1
      %p177 = por %p175, %p176
      %p178 = scmp.ne.s32.totalorder %s170, %s173
      %p179 = scmp.eq.s32.totalorder %s24, 0
      %p180 = por %p178, %p179
      %p181 = scmp.ne.s32.totalorder %s170, %s173
      %p182 = scmp.eq.s32.totalorder %s29, 1
      %p183 = por %p181, %p182
      %p184 = scmp.ne.s32.totalorder %s173, %s174
      %p185 = scmp.eq.s32.totalorder %s29, 0
      %p186 = por %p184, %p185
      %p187 = scmp.ne.s32.totalorder %s173, %s174
      %p188 = scmp.eq.s32.totalorder %s30, 1
      %p189 = por %p187, %p188
      %p191 = scmp.ne.s32.totalorder %s174, %s190
      %p192 = scmp.eq.s32.totalorder %s30, 0
      %p193 = por %p191, %p192
      %p194 = scmp.le.s32.totalorder 1, %s24
      %p195 = scmp.lt.s32.totalorder %s24, 3
      %p196 = pnand %p194, %p195
      %p197 = pneg %p196
      // Predicated region
      $region9: #{tpu_custom_call.1} parent=5 // pred_check
        _
      $region10: #{tpu_custom_call.1} parent=5 // pred_check_branch
        %199 = sbr.rel (%p196) target = $region12
      $region11: #{tpu_custom_call.1} parent=5 // pred_region
        %s200 = ssub.s32 %s24, 1
        // Predicated region
        $region13: #{tpu_custom_call.1} parent=11 // pred_check
          %p201 = pneg %p71
        $region14: #{tpu_custom_call.1} parent=11 // pred_check_branch
          %203 = sbr.rel (%p201) target = $region16
        $region15: #{tpu_custom_call.1} parent=11 // pred_region
          %s205 = ssub.s32 128, 128
          %206 = vsyncadd [#allocation7], %s205
          %s208 = sshll.u32 [#allocation6], 4
          %s209 = int_to_ptr.vmem [resolvable:$true] %s208
          %211 = dma.hbm_to_vmem [thread:$0]  %s1, 128, %s209, [#allocation7]
        $region16: #{tpu_custom_call.1} parent=11 // pred_fallthru
          _
        // Predicated region
        $region17: #{tpu_custom_call.1} parent=11 // pred_check
          %p212 = pneg %p92
        $region18: #{tpu_custom_call.1} parent=11 // pred_check_branch
          %214 = sbr.rel (%p212) target = $region20
        $region19: #{tpu_custom_call.1} parent=11 // pred_region
          %s216 = ssub.s32 512, 512
          %217 = vsyncadd [#allocation7], %s216
          %s218 = sshll.u32 [#allocation8], 4
          %s219 = int_to_ptr.vmem [resolvable:$true] %s218
          %224 = dma.hbm_to_vmem [thread:$0]  %s2, 512, %s219, [#allocation7], 128, 128, 8
        $region20: #{tpu_custom_call.1} parent=11 // pred_fallthru
          _
        // Predicated region
        $region21: #{tpu_custom_call.1} parent=11 // pred_check
          %p225 = pneg %p113
        $region22: #{tpu_custom_call.1} parent=11 // pred_check_branch
          %227 = sbr.rel (%p225) target = $region24
        $region23: #{tpu_custom_call.1} parent=11 // pred_region
          %s229 = ssub.s32 1024, 1024
          %230 = vsyncadd [#allocation10], %s229
          %s231 = sshll.u32 [#allocation9], 4
          %s232 = int_to_ptr.vmem [resolvable:$true] %s231
          %237 = dma.hbm_to_vmem [thread:$0]  %s3, 1024, %s232, [#allocation10], 64, 64, 4
        $region24: #{tpu_custom_call.1} parent=11 // pred_fallthru
          _
        // Predicated region
        $region25: #{tpu_custom_call.1} parent=11 // pred_check
          %p238 = pneg %p134
        $region26: #{tpu_custom_call.1} parent=11 // pred_check_branch
          %240 = sbr.rel (%p238) target = $region28
        $region27: #{tpu_custom_call.1} parent=11 // pred_region
          _
        $region28: #{tpu_custom_call.1} parent=11 // pred_fallthru
          _
      $region12: #{tpu_custom_call.1} parent=5 // pred_fallthru
        _
      %p241 = scmp.lt.s32.totalorder %s24, 2
      // Predicated region
      $region29: #{tpu_custom_call.1} parent=5 // pred_check
        %p242 = pneg %p241
      $region30: #{tpu_custom_call.1} parent=5 // pred_check_branch
        %244 = sbr.rel (%p242) target = $region32
      $region31: #{tpu_custom_call.1} parent=5 // pred_region
        // Predicated region
        $region33: #{tpu_custom_call.1} parent=31 // pred_check
          %p245 = pneg %p44
        $region34: #{tpu_custom_call.1} parent=31 // pred_check_branch
          %247 = sbr.rel (%p245) target = $region36
        $region35: #{tpu_custom_call.1} parent=31 // pred_region
          %s248 = sand.u32 %s34, 1
          %s249 = scalar_lea.sflag [#allocation4], %s248
          %s250 = sand.u32 %s34, 1
          %s251 = smul.addr %s250, 16
          %s252 = scalar_lea.vmem [#allocation3], %s251
          %s254 = ssub.s32 256, 256
          %255 = vsyncadd %s249, %s254
          %s256 = smul.addr %s24, 2
          %s257 = smul.addr %s256, 128
          %s258 = scalar_lea.hbm %s0, %s257
          %s259 = sshll.u32 %s252, 4
          %s260 = int_to_ptr.vmem [resolvable:$true] %s259
          %265 = dma.hbm_to_vmem [thread:$0]  %s258, 256, %s260, %s249, 128, 128, 8
        $region36: #{tpu_custom_call.1} parent=31 // pred_fallthru
          _
      $region32: #{tpu_custom_call.1} parent=5 // pred_fallthru
        _
      %p266 = scmp.le.s32.totalorder 1, %s24
      %p267 = scmp.lt.s32.totalorder %s24, 3
      %p268 = pnand %p266, %p267
      %p269 = pneg %p268
      // Predicated region
      $region37: #{tpu_custom_call.1} parent=5 // pred_check
        _
      $region38: #{tpu_custom_call.1} parent=5 // pred_check_branch
        %271 = sbr.rel (%p268) target = $region40
      $region39: #{tpu_custom_call.1} parent=5 // pred_region
        %s272 = ssub.s32 %s24, 1
        %s273 = sand.u32 %s37, 1
        %s274 = scalar_lea.sflag [#allocation4], %s273
        %s275 = sand.u32 %s37, 1
        %s276 = smul.addr %s275, 16
        %s277 = scalar_lea.vmem [#allocation3], %s276
        // Predicated region
        $region41: #{tpu_custom_call.1} parent=39 // pred_check
          %p278 = pneg %p50
        $region42: #{tpu_custom_call.1} parent=39 // pred_check_branch
          %280 = sbr.rel (%p278) target = $region44
        $region43: #{tpu_custom_call.1} parent=39 // pred_region
          %281 = dma.done %s274, 256
        $region44: #{tpu_custom_call.1} parent=39 // pred_fallthru
          _
        // Predicated region
        $region45: #{tpu_custom_call.1} parent=39 // pred_check
          %p282 = pneg %p71
        $region46: #{tpu_custom_call.1} parent=39 // pred_check_branch
          %284 = sbr.rel (%p282) target = $region48
        $region47: #{tpu_custom_call.1} parent=39 // pred_region
          %285 = dma.done [#allocation7], 128
        $region48: #{tpu_custom_call.1} parent=39 // pred_fallthru
          _
        // Predicated region
        $region49: #{tpu_custom_call.1} parent=39 // pred_check
          %p286 = pneg %p92
        $region50: #{tpu_custom_call.1} parent=39 // pred_check_branch
          %288 = sbr.rel (%p286) target = $region52
        $region51: #{tpu_custom_call.1} parent=39 // pred_region
          %289 = dma.done [#allocation7], 512
        $region52: #{tpu_custom_call.1} parent=39 // pred_fallthru
          _
        // Predicated region
        $region53: #{tpu_custom_call.1} parent=39 // pred_check
          %p290 = pneg %p113
        $region54: #{tpu_custom_call.1} parent=39 // pred_check_branch
          %292 = sbr.rel (%p290) target = $region56
        $region55: #{tpu_custom_call.1} parent=39 // pred_region
          %293 = dma.done [#allocation10], 1024
        $region56: #{tpu_custom_call.1} parent=39 // pred_fallthru
          _
        %s294 = sand.u32 %s37, 1
        %s295 = scalar_lea.sflag [#allocation4], %s294
        %s296 = sand.u32 %s37, 1
        %s297 = smul.addr %s296, 16
        %s298 = scalar_lea.vmem [#allocation3], %s297
        %p299 = pneg %p50
        %p300 = pneg %p47
        %p301 = pneg %p71
        %p302 = pneg %p68
        %p303 = pneg %p92
        %p304 = pneg %p89
        %p305 = pneg %p113
        %p306 = pneg %p110
        %p307 = pneg %p134
        %p308 = pneg %p131
        %p309 = pneg %p160
        %p310 = pneg %p157
        %s311 = sand.u32 %s147, 1
        %s312 = scalar_lea.sflag [#allocation5], %s311
        %s313 = sand.u32 %s147, 1
        %s314 = smul.addr %s313, 8
        %s315 = scalar_lea.vmem [#allocation11], %s314
        %p316 = pneg %p186
        %p317 = pneg %p183
        %s318 = sand.u32 %s173, 1
        %s319 = scalar_lea.sflag [#allocation13], %s318
        %s320 = sand.u32 %s173, 1
        %s321 = smul.addr %s320, 8
        %s322 = scalar_lea.vmem [#allocation12], %s321
        %v324 = vld [vmem:[#allocation6] sm:$0xff]
        %v325 = vld [vmem:[#allocation8] sm:$0xff]
        %v326 = vadd.f32 %v324, %v325
        %327 = vst [vmem:[#allocation2] sm:$0xff] %v326
        %v328 = vld [vmem:[%s277] sm:$0xff]
        %v329 = vld [vmem:[%s277 + $0x8] sm:$0xff]
        %v330 = vld [vmem:[#allocation8 + $0x8] sm:$0xff]
        %v331 = vld [vmem:[#allocation8 + $0x10] sm:$0xff]
        %v332 = vadd.f32 %v328, %v330
        %v333 = vadd.f32 %v329, %v331
        %334 = vst [vmem:[#allocation2 + $0x8] sm:$0xff] %v332
        %335 = vst [vmem:[#allocation2 + $0x10] sm:$0xff] %v333
        %v336 = vld [vmem:[#allocation8 + $0x18] sm:$0xff]
        %v337 = vadd.f32 %v324, %v336
        %338 = vst [vmem:[#allocation2 + $0x18] sm:$0xff] %v337
        %v339 = vld [vmem:[#allocation2] sm:$0xff]
        %v340 = vld [vmem:[#allocation2 + $0x8] sm:$0xff]
        %v341 = vld [vmem:[#allocation2 + $0x10] sm:$0xff]
        %v342 = vld [vmem:[#allocation2 + $0x18] sm:$0xff]
        %v343 = vpack.c.bf16 %v340, %v339
        %v344 = vpack.c.bf16 %v342, %v341
        %v345 = vld [vmem:[#allocation9] sm:$0xf]
        %v346 = vld [vmem:[#allocation9 + $0x4] sm:$0xf]
        %v347 = vld [vmem:[#allocation9 + $0x8] sm:$0xf]
        %v348 = vld [vmem:[#allocation9 + $0xc] sm:$0xf]
        %v349 = vld [vmem:[#allocation9 + $0x10] sm:$0xf]
        %v350 = vld [vmem:[#allocation9 + $0x14] sm:$0xf]
        %v351 = vld [vmem:[#allocation9 + $0x18] sm:$0xf]
        %v352 = vld [vmem:[#allocation9 + $0x1c] sm:$0xf]
        %v353 = vld [vmem:[#allocation9 + $0x20] sm:$0xf]
        %v354 = vld [vmem:[#allocation9 + $0x24] sm:$0xf]
        %v355 = vld [vmem:[#allocation9 + $0x28] sm:$0xf]
        %v356 = vld [vmem:[#allocation9 + $0x2c] sm:$0xf]
        %v357 = vld [vmem:[#allocation9 + $0x30] sm:$0xf]
        %v358 = vld [vmem:[#allocation9 + $0x34] sm:$0xf]
        %v359 = vld [vmem:[#allocation9 + $0x38] sm:$0xf]
        %v360 = vld [vmem:[#allocation9 + $0x3c] sm:$0xf]
        %v361 = vld [vmem:[%s4] sm:$0x1]
        %v363 = vlaneseq
        %v364 = vshrl.u32 %v363, 7
        %v365 = vsub.s32 0, %v364
        %v366 = vrot.slane %v361, %v365
        %v384 = vunpack.c.l.b16 %v345
        %v385 = vunpack.c.l.b16 %v346
        %v386 = vunpack.c.l.b16 %v347
        %v387 = vunpack.c.l.b16 %v348
        %v388 = vunpack.c.l.b16 %v349
        %v389 = vunpack.c.l.b16 %v350
        %v390 = vunpack.c.l.b16 %v351
        %v391 = vunpack.c.l.b16 %v352
        %v392 = vunpack.c.l.b16 %v353
        %v393 = vunpack.c.l.b16 %v354
        %v394 = vunpack.c.l.b16 %v355
        %v395 = vunpack.c.l.b16 %v356
        %v396 = vunpack.c.l.b16 %v357
        %v397 = vunpack.c.l.b16 %v358
        %v398 = vunpack.c.l.b16 %v359
        %v399 = vunpack.c.l.b16 %v360
        %v400 = vpack.c.b16 %v385, %v384
        %v401 = vpack.c.b16 %v387, %v386
        %v402 = vpack.c.b16 %v389, %v388
        %v403 = vpack.c.b16 %v391, %v390
        %v404 = vpack.c.b16 %v393, %v392
        %v405 = vpack.c.b16 %v395, %v394
        %v406 = vpack.c.b16 %v397, %v396
        %v407 = vpack.c.b16 %v399, %v398
        %416 = vmatprep.subr.bf16.mxu0 0
        %417 = vmatpush1.bf16.msra.mxu0 %v400
        %418 = vmatprep.subr.bf16.mxu0 0
        %419 = vmatpush1.bf16.msra.mxu0 %v401
        %420 = vmatprep.subr.bf16.mxu0 0
        %421 = vmatpush1.bf16.msra.mxu0 %v402
        %422 = vmatprep.subr.bf16.mxu0 0
        %423 = vmatpush1.bf16.msra.mxu0 %v403
        %424 = vmatprep.subr.bf16.mxu0 0
        %425 = vmatpush1.bf16.msra.mxu0 %v404
        %426 = vmatprep.subr.bf16.mxu0 0
        %427 = vmatpush1.bf16.msra.mxu0 %v405
        %428 = vmatprep.subr.bf16.mxu0 0
        %429 = vmatpush1.bf16.msra.mxu0 %v406
        %430 = vmatprep.subr.bf16.mxu0 0
        %431 = vmatpush1.bf16.msra.mxu0 %v407
        %432 = vmatprep.subr.bf16.mxu0 0
        %433 = vmatpush1.bf16.msra.mxu0 0
        %434 = vmatprep.subr.bf16.mxu0 0
        %435 = vmatpush1.bf16.msra.mxu0 0
        %436 = vmatprep.subr.bf16.mxu0 0
        %437 = vmatpush1.bf16.msra.mxu0 0
        %438 = vmatprep.subr.bf16.mxu0 0
        %439 = vmatpush1.bf16.msra.mxu0 0
        %440 = vmatprep.subr.bf16.mxu0 0
        %441 = vmatpush1.bf16.msra.mxu0 0
        %442 = vmatprep.subr.bf16.mxu0 0
        %443 = vmatpush1.bf16.msra.mxu0 0
        %444 = vmatprep.subr.bf16.mxu0 0
        %445 = vmatpush1.bf16.msra.mxu0 0
        %446 = vmatprep.subr.bf16.mxu0 0
        %447 = vmatpush1.bf16.msra.mxu0 0
        %448 = vmatprep.mubr.bf16.mxu0 0
        %449 = vmatmul.mubr.bf16.gmra.mrb[0].mxu0 %v343
        %v450 = vpop.f32.mrb[0].mxu0
        %v451 = vpop.f32.mrb[0].mxu0
        %v452 = vpop.f32.mrb[0].mxu0
        %v453 = vadd.f32 %v366, %v452
        %v454 = vpop.f32.mrb[0].mxu0
        %455 = vmatprep.mubr.bf16.mxu0 0
        %456 = vmatmul.mubr.bf16.gmra.mrb[0].mxu0 %v344
        %v457 = vpop.f32.mrb[0].mxu0
        %v458 = vadd.f32 %v366, %v457
        %v459 = vpop.f32.mrb[0].mxu0
        %v460 = vpop.f32.mrb[0].mxu0
        %v461 = vadd.f32 %v366, %v460
        %v462 = vpop.f32.mrb[0].mxu0
        %463 = vdwg.mxu0
        %v464 = vmul.f32 %v453, %v453
        %v465 = vmul.f32 %v458, %v458
        %v466 = vmul.f32 %v461, %v461
        %v467 = vmul.f32 %v453, %v464
        %v468 = vmul.f32 %v458, %v465
        %v469 = vmul.f32 %v461, %v466
        %v470 = vmul.f32 %v467, 0.044715
        %v471 = vmul.f32 %v468, 0.044715
        %v472 = vmul.f32 %v469, 0.044715
        %v473 = vadd.f32 %v453, %v470
        %v474 = vadd.f32 %v458, %v471
        %v475 = vadd.f32 %v461, %v472
        %v476 = vmul.f32 %v473, 0.7978846
        %v477 = vmul.f32 %v474, 0.7978846
        %v478 = vmul.f32 %v475, 0.7978846
        %v479 = vtanh.pop %v476
        %v480 = vtanh.pop %v477
        %v481 = vtanh.pop %v478
        %v482 = vadd.f32 %v479, 1.0
        %v483 = vadd.f32 %v480, 1.0
        %v484 = vadd.f32 %v481, 1.0
        %v485 = vmul.f32 %v482, 0.5
        %v486 = vmul.f32 %v483, 0.5
        %v487 = vmul.f32 %v484, 0.5
        %v488 = vmul.f32 %v453, %v485
        %v489 = vmul.f32 %v458, %v486
        %v490 = vmul.f32 %v461, %v487
        %v491 = vpack.c.bf16 %v489, %v488
        %v493 = vunpack.c.l.b16 %v491
        %v494 = vunpack.c.h.b16 %v491
        %v495 = vpack.c.b16 %v493, %v493
        %v496 = vpack.c.b16 %v494, %v494
        %499 = vst [vmem:[%s315] sm:$0xf] %v495
        %500 = vst [vmem:[%s315 + $0x4] sm:$0xf] %v496
        %501 = vst [vmem:[%s322] sm:$0xff] %v490
        %s502 = sand.u32 %s147, 1
        %s503 = scalar_lea.sflag [#allocation5], %s502
        %s504 = sand.u32 %s147, 1
        %s505 = smul.addr %s504, 8
        %s506 = scalar_lea.vmem [#allocation11], %s505
        %s507 = sand.u32 %s173, 1
        %s508 = scalar_lea.sflag [#allocation13], %s507
        %s509 = sand.u32 %s173, 1
        %s510 = smul.addr %s509, 8
        %s511 = scalar_lea.vmem [#allocation12], %s510
        // Predicated region
        $region57: #{tpu_custom_call.1} parent=39 // pred_check
          %p512 = pneg %p157
        $region58: #{tpu_custom_call.1} parent=39 // pred_check_branch
          %514 = sbr.rel (%p512) target = $region60
        $region59: #{tpu_custom_call.1} parent=39 // pred_region
          %s516 = ssub.s32 128, 128
          %517 = vsyncadd %s503, %s516
          %s518 = smul.addr %s29, 2
          %s519 = smul.addr %s518, 64
          %s520 = scalar_lea.hbm %s5, %s519
          %s521 = sshll.u32 %s506, 4
          %s522 = int_to_ptr.vmem [resolvable:$true] %s521
          %527 = dma.vmem_to_hbm [thread:$0]  %s522, 128, %s520, %s503, 64, 64, 4
        $region60: #{tpu_custom_call.1} parent=39 // pred_fallthru
          _
        // Predicated region
        $region61: #{tpu_custom_call.1} parent=39 // pred_check
          %p528 = pneg %p183
        $region62: #{tpu_custom_call.1} parent=39 // pred_check_branch
          %530 = sbr.rel (%p528) target = $region64
        $region63: #{tpu_custom_call.1} parent=39 // pred_region
          %s532 = ssub.s32 128, 128
          %533 = vsyncadd %s508, %s532
          %s534 = smul.addr %s29, 128
          %s535 = scalar_lea.hbm %s6, %s534
          %s537 = sshll.u32 %s511, 4
          %s538 = int_to_ptr.vmem [resolvable:$true] %s537
          %540 = dma.vmem_to_hbm [thread:$0]  %s538, 128, %s535, %s508
        $region64: #{tpu_custom_call.1} parent=39 // pred_fallthru
          _
      $region40: #{tpu_custom_call.1} parent=5 // pred_fallthru
        _
      %p541 = scmp.le.s32.totalorder 2, %s24
      // Predicated region
      $region65: #{tpu_custom_call.1} parent=5 // pred_check
        %p542 = pneg %p541
      $region66: #{tpu_custom_call.1} parent=5 // pred_check_branch
        %544 = sbr.rel (%p542) target = $region68
      $region67: #{tpu_custom_call.1} parent=5 // pred_region
        %s545 = ssub.s32 %s24, 2
        // Predicated region
        $region69: #{tpu_custom_call.1} parent=67 // pred_check
          %p546 = pneg %p163
        $region70: #{tpu_custom_call.1} parent=67 // pred_check_branch
          %548 = sbr.rel (%p546) target = $region72
        $region71: #{tpu_custom_call.1} parent=67 // pred_region
          %s549 = sand.u32 %s148, 1
          %s550 = scalar_lea.sflag [#allocation5], %s549
          %s551 = sand.u32 %s148, 1
          %s552 = smul.addr %s551, 8
          %s553 = scalar_lea.vmem [#allocation11], %s552
          %554 = dma.done %s550, 128
        $region72: #{tpu_custom_call.1} parent=67 // pred_fallthru
          _
        // Predicated region
        $region73: #{tpu_custom_call.1} parent=67 // pred_check
          %p555 = pneg %p189
        $region74: #{tpu_custom_call.1} parent=67 // pred_check_branch
          %557 = sbr.rel (%p555) target = $region76
        $region75: #{tpu_custom_call.1} parent=67 // pred_region
          %s558 = sand.u32 %s174, 1
          %s559 = scalar_lea.sflag [#allocation13], %s558
          %s560 = sand.u32 %s174, 1
          %s561 = smul.addr %s560, 8
          %s562 = scalar_lea.vmem [#allocation12], %s561
          %563 = dma.done %s559, 128
        $region76: #{tpu_custom_call.1} parent=67 // pred_fallthru
          _
      $region68: #{tpu_custom_call.1} parent=5 // pred_fallthru
        _
    $region6: #{tpu_custom_call.1} parent=1 // loop_footer
      %s28 = sadd.s32 1, %s24
    $region7: #{tpu_custom_call.1} parent=1 // loop_footer_branch
      %23 = sbr.rel target = $region3
    $region8: #{tpu_custom_call.1} parent=1 // loop_exit
      _
    %564 = vsyncpa [#allocation4], 1
    %s565 = scalar_lea.sflag [#allocation4], 1
    %566 = vsyncpa %s565, 1
    %567 = vsyncpa [#allocation7], 1
    %568 = vsyncpa [#allocation10], 1
    %569 = vsyncpa [#allocation5], 1
    %s570 = scalar_lea.sflag [#allocation5], 1
    %571 = vsyncpa %s570, 1
    %572 = vsyncpa [#allocation13], 1
    %s573 = scalar_lea.sflag [#allocation13], 1
    %574 = vsyncpa %s573, 1

</llo_original>
